<compile_context>
chip_gen: v6e
topology: v6e:2x2x1
jax: 0.10.0
libtpu: 0.0.40
codegen_flags: <defaults>
</compile_context>

<pallas_src>
import jax
import jax.numpy as jnp
from jax import lax
from jax.experimental import pallas as pl
from jax.experimental.pallas import tpu as pltpu


def _round_up(x, m):
    return ((x + m - 1) // m) * m


def _mlm_head_kernel_full_k(x_ref, w_ref, b_ref, o_ref):
    """Full-K path: one (j, i) step computes an entire (tm, tn) output tile.

    x_ref : (tm, K)   activation tile
    w_ref : (tn, K)   weight tile (PyTorch [V, E] layout, NOT transposed)
    b_ref : (1, tn)   bias tile
    o_ref : (tm, tn)  output tile
    """
    acc = lax.dot_general(
        x_ref[...],
        w_ref[...],
        dimension_numbers=(((1,), (1,)), ((), ())),  # contract E with E
        preferred_element_type=jnp.float32,
    )
    o_ref[...] = (acc + b_ref[...].astype(jnp.float32)).astype(o_ref.dtype)


def _mlm_head_kernel_split_k(x_ref, w_ref, b_ref, o_ref, acc_ref):
    """Split-K fallback (very large embed): k is the innermost grid axis."""
    k = pl.program_id(2)

    @pl.when(k == 0)
    def _():
        acc_ref[...] = jnp.zeros_like(acc_ref)

    acc_ref[...] += lax.dot_general(
        x_ref[...],
        w_ref[...],
        dimension_numbers=(((1,), (1,)), ((), ())),
        preferred_element_type=jnp.float32,
    )

    @pl.when(k == pl.num_programs(2) - 1)
    def _():
        o_ref[...] = (acc_ref[...] + b_ref[...].astype(jnp.float32)).astype(
            o_ref.dtype
        )


def mlm_head(x, weight, bias, *, tm=256, tn=512, tk_max=4096):
    """x: [B, S, E]; weight: [V, E]; bias: [V] -> [B, S, V]."""
    B, S, E = x.shape
    V, E2 = weight.shape
    assert E == E2 and bias.shape == (V,)

    M, K, N = B * S, E, V

    # Tile sizes: clamp to the (aligned) problem size; keep (8, 128) legality.
    tm = min(tm, _round_up(M, 8))            # multiple of 8 sublanes
    tn = min(tn, _round_up(N, 128))          # multiple of 128 lanes
    k_aligned = _round_up(K, 128)
    tk = min(tk_max, k_aligned)              # full K when it fits

    # Padded problem dims (multiples of the chosen tiles).
    M_pad = _round_up(M, tm)
    N_pad = _round_up(N, tn)
    K_pad = _round_up(k_aligned, tk)

    x2d = x.reshape(M, K)
    if (M_pad, K_pad) != (M, K):
        x2d = jnp.pad(x2d, ((0, M_pad - M), (0, K_pad - K)))
    w = weight
    if (N_pad, K_pad) != (N, K):
        w = jnp.pad(w, ((0, N_pad - N), (0, K_pad - K)))
    b2d = bias.reshape(1, N)
    if N_pad != N:
        b2d = jnp.pad(b2d, ((0, 0), (0, N_pad - N)))

    out_dtype = x.dtype
    full_k = tk == K_pad

    # VMEM budget: double-buffered inputs + output + (optional) accumulator.
    in_bytes = jnp.dtype(x2d.dtype).itemsize
    out_bytes = jnp.dtype(out_dtype).itemsize
    vmem_needed = (
        2 * (tm * tk + tn * tk) * in_bytes
        + 2 * tm * tn * out_bytes
        + 2 * tn * jnp.dtype(bias.dtype).itemsize
        + (0 if full_k else tm * tn * 4)
    )
    vmem_limit = int(max(32 << 20, min(vmem_needed + (8 << 20), 48 << 20)))

    if full_k:
        # Grid: vocab axis outermost, M inner -> W blocks DMA'd exactly once.
        grid = (N_pad // tn, M_pad // tm)
        grid_spec = pltpu.PrefetchScalarGridSpec(
            num_scalar_prefetch=0,
            grid=grid,
            in_specs=[
                pl.BlockSpec((tm, tk), lambda j, i: (i, 0)),   # x
                pl.BlockSpec((tn, tk), lambda j, i: (j, 0)),   # W (untransposed)
                pl.BlockSpec((1, tn), lambda j, i: (0, j)),    # bias
            ],
            out_specs=pl.BlockSpec((tm, tn), lambda j, i: (i, j)),
        )
        kernel = _mlm_head_kernel_full_k
        dim_sem = ("parallel", "parallel")
    else:
        grid = (N_pad // tn, M_pad // tm, K_pad // tk)
        grid_spec = pltpu.PrefetchScalarGridSpec(
            num_scalar_prefetch=0,
            grid=grid,
            in_specs=[
                pl.BlockSpec((tm, tk), lambda j, i, k: (i, k)),   # x
                pl.BlockSpec((tn, tk), lambda j, i, k: (j, k)),   # W
                pl.BlockSpec((1, tn), lambda j, i, k: (0, j)),    # bias
            ],
            out_specs=pl.BlockSpec((tm, tn), lambda j, i, k: (i, j)),
            scratch_shapes=[pltpu.VMEM((tm, tn), jnp.float32)],
        )
        kernel = _mlm_head_kernel_split_k
        dim_sem = ("parallel", "parallel", "arbitrary")

    out2d = pl.pallas_call(
        kernel,
        out_shape=jax.ShapeDtypeStruct((M_pad, N_pad), out_dtype),
        grid_spec=grid_spec,
        compiler_params=pltpu.CompilerParams(
            dimension_semantics=dim_sem,
            vmem_limit_bytes=vmem_limit,
        ),
    )(x2d, w, b2d)

    if (M_pad, N_pad) != (M, N):
        out2d = out2d[:M, :N]
    return out2d.reshape(B, S, N)


if __name__ == "__main__":
    # Small shapes implied by the module: embed_size=128, vocab_size=256,
    # batch=2, seq=8.
    batch, seq, embed_size, vocab_size = 2, 8, 128, 256

    key = jax.random.PRNGKey(0)
    kx, kw, kb = jax.random.split(key, 3)

    x = jax.random.normal(kx, (batch, seq, embed_size), dtype=jnp.float32)
    # Deterministic synthetic nn.Linear params (PyTorch shapes: W [V, E], b [V]).
    bound = 1.0 / (embed_size ** 0.5)
    weight = jax.random.uniform(
        kw, (vocab_size, embed_size), minval=-bound, maxval=bound,
        dtype=jnp.float32,
    )
    bias = jax.random.uniform(
        kb, (vocab_size,), minval=-bound, maxval=bound, dtype=jnp.float32
    )

    out = mlm_head(x, weight, bias)
    jax.block_until_ready(out)

    # Reference check against plain JAX (same semantics as torch.nn.Linear).
    ref = x @ weight.T + bias
    assert out.shape == (batch, seq, vocab_size)
    assert jnp.allclose(out, ref, atol=1e-5, rtol=1e-5)

    print("KERNEL_OK")
</pallas_src>

<mosaic_0001>
module attributes {stable_mosaic.version = 11 : i64} {
  func.func @_mlm_head_kernel_full_k(%arg0: i32, %arg1: i32, %arg2: memref<16x128xf32, #tpu.memory_space<vmem>>, %arg3: memref<256x128xf32, #tpu.memory_space<vmem>>, %arg4: memref<1x256xf32, #tpu.memory_space<vmem>>, %arg5: memref<16x256xf32, #tpu.memory_space<vmem>>) attributes {dimension_semantics = [#tpu.dimension_semantics<parallel>, #tpu.dimension_semantics<parallel>], iteration_bounds = array<i64: 1, 1>, scalar_prefetch = 0 : i64, scratch_operands = 0 : i64, tpu.core_type = #tpu.core_type<tc>, window_params = [{transform_indices = @transform_0, window_bounds = array<i64: 16, 128>}, {transform_indices = @transform_1, window_bounds = array<i64: 256, 128>}, {transform_indices = @transform_2, window_bounds = array<i64: 1, 256>}, {transform_indices = @transform_3, window_bounds = array<i64: 16, 256>}]} {
    %c0 = arith.constant 0 : index
    %c0_0 = arith.constant 0 : index
    %0 = vector.load %arg2[%c0, %c0_0] : memref<16x128xf32, #tpu.memory_space<vmem>>, vector<16x128xf32>
    %c0_1 = arith.constant 0 : index
    %c0_2 = arith.constant 0 : index
    %1 = vector.load %arg3[%c0_1, %c0_2] : memref<256x128xf32, #tpu.memory_space<vmem>>, vector<256x128xf32>
    %cst = arith.constant dense<0.000000e+00> : vector<16x256xf32>
    %2 = tpu.matmul %0, %1, %cst {dimension_numbers = #tpu.dot_dimension_numbers<[1], [1], [0], [0], [0, 0, 1, 0], [], []>} : vector<16x128xf32>, vector<256x128xf32>, vector<16x256xf32> -> vector<16x256xf32>
    %c0_3 = arith.constant 0 : index
    %c0_4 = arith.constant 0 : index
    %3 = vector.load %arg4[%c0_3, %c0_4] : memref<1x256xf32, #tpu.memory_space<vmem>>, vector<1x256xf32>
    %4 = vector.broadcast %3 : vector<1x256xf32> to vector<16x256xf32>
    %5 = arith.addf %2, %4 : vector<16x256xf32>
    %c0_5 = arith.constant 0 : index
    %c0_6 = arith.constant 0 : index
    %6 = vector.load %arg5[%c0_5, %c0_6] : memref<16x256xf32, #tpu.memory_space<vmem>>, vector<16x256xf32>
    tpu.vector_store %arg5[%c0_5, %c0_6], %5 {strides = array<i32>} : memref<16x256xf32, #tpu.memory_space<vmem>>, vector<16x256xf32>,
    return
  }
  func.func @transform_0(%arg0: i32, %arg1: i32) -> (i32, i32) {
    %c0_i32 = arith.constant 0 : i32
    %c0_i32_0 = arith.constant 0 : i32
    return %arg1, %c0_i32 : i32, i32
  }
  func.func @transform_1(%arg0: i32, %arg1: i32) -> (i32, i32) {
    %c0_i32 = arith.constant 0 : i32
    %c0_i32_0 = arith.constant 0 : i32
    return %arg0, %c0_i32 : i32, i32
  }
  func.func @transform_2(%arg0: i32, %arg1: i32) -> (i32, i32) {
    %c0_i32 = arith.constant 0 : i32
    %c0_i32_0 = arith.constant 0 : i32
    return %c0_i32, %arg0 : i32, i32
  }
  func.func @transform_3(%arg0: i32, %arg1: i32) -> (i32, i32) {
    %c0_i32 = arith.constant 0 : i32
    return %arg1, %arg0 : i32, i32
  }
}

</mosaic_0001>

<llo_original>
// kernel: tpu_custom_call.1
$region0: #{tpu_custom_call.1}
  #allocation0 [shape = 'u32[]', space=smem, size = 0x4, offset = 0x4, fixed_abs, tag = 'smem constant byte address 0x4 - core index']
  #allocation1 [shape = 'u32[144,128]{1,0:T(1,128)}', space=vmem, size = 0x12000, scoped, tag = 'internal scratch']
  %s0 = inlined_call_operand.hbm [shape: f32[16,128], index: 0, kind: input, shape index: {}]
  %s1 = inlined_call_operand.hbm [shape: f32[256,128], index: 1, kind: input, shape index: {}]
  %s2 = inlined_call_operand.vmem [shape: f32[1,256], index: 2, kind: input, shape index: {}]
  %s3 = inlined_call_operand.hbm [shape: f32[16,256], index: 3, kind: output, shape index: {}]
  %s4 = sld [smem:[#allocation0]]
  $region30: #{tpu_custom_call.1} parent=0
    _
  %s6 = ssub.s32 1, %s4
  %s7 = scalar_select 0, %s6, %s4
  $region1: #{tpu_custom_call.1} parent=0
    #allocation2 [shape = 'u8[8192]{0}', space=vmem, size = 0x2000, scoped, tag = 'input window, operand 0, single buffered']
    #allocation3 [shape = 's32[1]{0}', space=sflag, size = 0x4, scoped, tag = 'scoped memory for tpu_custom_call.1']
    #allocation4 [shape = 's32[1]{0}', space=sflag, size = 0x4, scoped, tag = 'scoped memory for tpu_custom_call.1']
    #allocation5 [shape = 'u8[131072]{0}', space=vmem, size = 0x20000, scoped, tag = 'input window, operand 1, single buffered']
    #allocation6 [shape = 's32[1]{0}', space=sflag, size = 0x4, scoped, tag = 'scoped memory for tpu_custom_call.1']
    #allocation7 [shape = 'u8[16384]{0}', space=vmem, size = 0x4000, scoped, tag = 'output window, operand 0, single buffered']
    %8 = vsyncpa [#allocation3], 0
    %9 = vsyncpa [#allocation6], 0
    %10 = vsyncpa [#allocation4], 0
    // Predicated region
    $region2: #{tpu_custom_call.1} parent=1 // pred_check
      _
    $region3: #{tpu_custom_call.1} parent=1 // pred_check_branch
      %12 = sbr.rel (0) target = $region5
    $region4: #{tpu_custom_call.1} parent=1 // pred_region
      %s14 = ssub.s32 256, 256
      %15 = vsyncadd [#allocation3], %s14
      %s16 = sshll.u32 [#allocation2], 4
      %s17 = int_to_ptr.vmem [resolvable:$true] %s16
      %22 = dma.hbm_to_vmem [thread:$0]  %s0, 256, %s17, [#allocation3], 128, 128, 8
    $region5: #{tpu_custom_call.1} parent=1 // pred_fallthru
      _
    // Predicated region
    $region6: #{tpu_custom_call.1} parent=1 // pred_check
      _
    $region7: #{tpu_custom_call.1} parent=1 // pred_check_branch
      %24 = sbr.rel (0) target = $region9
    $region8: #{tpu_custom_call.1} parent=1 // pred_region
      %s26 = ssub.s32 4096, 4096
      %27 = vsyncadd [#allocation6], %s26
      %s28 = sshll.u32 [#allocation5], 4
      %s29 = int_to_ptr.vmem [resolvable:$true] %s28
      %34 = dma.hbm_to_vmem [thread:$0]  %s1, 4096, %s29, [#allocation6], 128, 128, 8
    $region9: #{tpu_custom_call.1} parent=1 // pred_fallthru
      _
    // Predicated region
    $region10: #{tpu_custom_call.1} parent=1 // pred_check
      _
    $region11: #{tpu_custom_call.1} parent=1 // pred_check_branch
      %36 = sbr.rel (0) target = $region13
    $region12: #{tpu_custom_call.1} parent=1 // pred_region
      _
    $region13: #{tpu_custom_call.1} parent=1 // pred_fallthru
      _
    // Predicated region
    $region14: #{tpu_custom_call.1} parent=1 // pred_check
      _
    $region15: #{tpu_custom_call.1} parent=1 // pred_check_branch
      %38 = sbr.rel (0) target = $region17
    $region16: #{tpu_custom_call.1} parent=1 // pred_region
      %39 = dma.done [#allocation3], 256
    $region17: #{tpu_custom_call.1} parent=1 // pred_fallthru
      _
    // Predicated region
    $region18: #{tpu_custom_call.1} parent=1 // pred_check
      _
    $region19: #{tpu_custom_call.1} parent=1 // pred_check_branch
      %41 = sbr.rel (0) target = $region21
    $region20: #{tpu_custom_call.1} parent=1 // pred_region
      %42 = dma.done [#allocation6], 4096
    $region21: #{tpu_custom_call.1} parent=1 // pred_fallthru
      _
    %v43 = vld [vmem:[#allocation2] sm:$0xff]
    %v44 = vld [vmem:[#allocation2 + $0x8] sm:$0xff]
    %v45 = vld [vmem:[#allocation5] sm:$0xff]
    %v46 = vld [vmem:[#allocation5 + $0x8] sm:$0xff]
    %v47 = vld [vmem:[#allocation5 + $0x10] sm:$0xff]
    %v48 = vld [vmem:[#allocation5 + $0x18] sm:$0xff]
    %v49 = vld [vmem:[#allocation5 + $0x20] sm:$0xff]
    %v50 = vld [vmem:[#allocation5 + $0x28] sm:$0xff]
    %v51 = vld [vmem:[#allocation5 + $0x30] sm:$0xff]
    %v52 = vld [vmem:[#allocation5 + $0x38] sm:$0xff]
    %v53 = vld [vmem:[#allocation5 + $0x40] sm:$0xff]
    %v54 = vld [vmem:[#allocation5 + $0x48] sm:$0xff]
    %v55 = vld [vmem:[#allocation5 + $0x50] sm:$0xff]
    %v56 = vld [vmem:[#allocation5 + $0x58] sm:$0xff]
    %v57 = vld [vmem:[#allocation5 + $0x60] sm:$0xff]
    %v58 = vld [vmem:[#allocation5 + $0x68] sm:$0xff]
    %v59 = vld [vmem:[#allocation5 + $0x70] sm:$0xff]
    %v60 = vld [vmem:[#allocation5 + $0x78] sm:$0xff]
    %v61 = vld [vmem:[#allocation5 + $0x80] sm:$0xff]
    %v62 = vld [vmem:[#allocation5 + $0x88] sm:$0xff]
    %v63 = vld [vmem:[#allocation5 + $0x90] sm:$0xff]
    %v64 = vld [vmem:[#allocation5 + $0x98] sm:$0xff]
    %v65 = vld [vmem:[#allocation5 + $0xa0] sm:$0xff]
    %v66 = vld [vmem:[#allocation5 + $0xa8] sm:$0xff]
    %v67 = vld [vmem:[#allocation5 + $0xb0] sm:$0xff]
    %v68 = vld [vmem:[#allocation5 + $0xb8] sm:$0xff]
    %v69 = vld [vmem:[#allocation5 + $0xc0] sm:$0xff]
    %v70 = vld [vmem:[#allocation5 + $0xc8] sm:$0xff]
    %v71 = vld [vmem:[#allocation5 + $0xd0] sm:$0xff]
    %v72 = vld [vmem:[#allocation5 + $0xd8] sm:$0xff]
    %v73 = vld [vmem:[#allocation5 + $0xe0] sm:$0xff]
    %v74 = vld [vmem:[#allocation5 + $0xe8] sm:$0xff]
    %v75 = vld [vmem:[#allocation5 + $0xf0] sm:$0xff]
    %v76 = vld [vmem:[#allocation5 + $0xf8] sm:$0xff]
    %v77 = vld [vmem:[%s2] sm:$0x3]
    %v79 = vlaneseq
    %v80 = vshrl.u32 %v79, 7
    %v81 = vsub.s32 0, %v80
    %v82 = vrot.slane %v77, %v81
    %v83 = vlaneseq
    %v84 = vshrl.u32 %v83, 7
    %v85 = vsub.s32 1, %v84
    %v86 = vrot.slane %v77, %v85
    %89 = vmatprep.subr.mxu0 0.0
    %90 = vmatpush1.xpose.msra.mxu0 %v60
    %91 = vmatprep.subr.mxu0 0.0
    %92 = vmatpush1.xpose.msra.mxu0 %v59
    %93 = vmatprep.subr.mxu0 0.0
    %94 = vmatpush1.xpose.msra.mxu0 %v58
    %95 = vmatprep.subr.mxu0 0.0
    %96 = vmatpush1.xpose.msra.mxu0 %v57
    %97 = vmatprep.subr.mxu0 0.0
    %98 = vmatpush1.xpose.msra.mxu0 %v56
    %99 = vmatprep.subr.mxu0 0.0
    %100 = vmatpush1.xpose.msra.mxu0 %v55
    %101 = vmatprep.subr.mxu0 0.0
    %102 = vmatpush1.xpose.msra.mxu0 %v54
    %103 = vmatprep.subr.mxu0 0.0
    %104 = vmatpush1.xpose.msra.mxu0 %v53
    %105 = vmatprep.subr.mxu0 0.0
    %106 = vmatpush1.xpose.msra.mxu0 %v52
    %107 = vmatprep.subr.mxu0 0.0
    %108 = vmatpush1.xpose.msra.mxu0 %v51
    %109 = vmatprep.subr.mxu0 0.0
    %110 = vmatpush1.xpose.msra.mxu0 %v50
    %111 = vmatprep.subr.mxu0 0.0
    %112 = vmatpush1.xpose.msra.mxu0 %v49
    %113 = vmatprep.subr.mxu0 0.0
    %114 = vmatpush1.xpose.msra.mxu0 %v48
    %115 = vmatprep.subr.mxu0 0.0
    %116 = vmatpush1.xpose.msra.mxu0 %v47
    %117 = vmatprep.subr.mxu0 0.0
    %118 = vmatpush1.xpose.msra.mxu0 %v46
    %119 = vmatprep.subr.mxu0 0.0
    %120 = vmatpush1.xpose.msra.mxu0 %v45
    %121 = vmatprep.subr.mxu0 0.0
    %122 = vmatpush2.xpose.msra.mxu0 %v76
    %123 = vmatprep.subr.mxu0 0.0
    %124 = vmatpush2.xpose.msra.mxu0 %v75
    %125 = vmatprep.subr.mxu0 0.0
    %126 = vmatpush2.xpose.msra.mxu0 %v74
    %127 = vmatprep.subr.mxu0 0.0
    %128 = vmatpush2.xpose.msra.mxu0 %v73
    %129 = vmatprep.subr.mxu0 0.0
    %130 = vmatpush2.xpose.msra.mxu0 %v72
    %131 = vmatprep.subr.mxu0 0.0
    %132 = vmatpush2.xpose.msra.mxu0 %v71
    %133 = vmatprep.subr.mxu0 0.0
    %134 = vmatpush2.xpose.msra.mxu0 %v70
    %135 = vmatprep.subr.mxu0 0.0
    %136 = vmatpush2.xpose.msra.mxu0 %v69
    %137 = vmatprep.subr.mxu0 0.0
    %138 = vmatpush2.xpose.msra.mxu0 %v68
    %139 = vmatprep.subr.mxu0 0.0
    %140 = vmatpush2.xpose.msra.mxu0 %v67
    %141 = vmatprep.subr.mxu0 0.0
    %142 = vmatpush2.xpose.msra.mxu0 %v66
    %143 = vmatprep.subr.mxu0 0.0
    %144 = vmatpush2.xpose.msra.mxu0 %v65
    %145 = vmatprep.subr.mxu0 0.0
    %146 = vmatpush2.xpose.msra.mxu0 %v64
    %147 = vmatprep.subr.mxu0 0.0
    %148 = vmatpush2.xpose.msra.mxu0 %v63
    %149 = vmatprep.subr.mxu0 0.0
    %150 = vmatpush2.xpose.msra.mxu0 %v62
    %151 = vmatprep.subr.mxu0 0.0
    %152 = vmatpush2.xpose.msra.mxu0 %v61
    %153 = vmatprep.mubr.f32.mxu0 0.0
    %154 = vmatmul.mubr.f32.gmra.mxu0 %v43
    %v155 = vpop.f32.mrf.mxu0
    %v156 = vadd.f32 %v82, %v155
    %v157 = vpop.f32.mrf.mxu0
    %v158 = vadd.f32 %v86, %v157
    %159 = vmatprep.mubr.f32.mxu0 0.0
    %160 = vmatmul.mubr.f32.gmra.mxu0 %v44
    %v161 = vpop.f32.mrf.mxu0
    %v162 = vadd.f32 %v82, %v161
    %v163 = vpop.f32.mrf.mxu0
    %v164 = vadd.f32 %v86, %v163
    %165 = vdwg.mxu0
    %166 = vst [vmem:[#allocation7] sm:$0xff] %v156
    %167 = vst [vmem:[#allocation7 + $0x8] sm:$0xff] %v158
    %168 = vst [vmem:[#allocation7 + $0x10] sm:$0xff] %v162
    %169 = vst [vmem:[#allocation7 + $0x18] sm:$0xff] %v164
    // Predicated region
    $region22: #{tpu_custom_call.1} parent=1 // pred_check
      _
    $region23: #{tpu_custom_call.1} parent=1 // pred_check_branch
      %171 = sbr.rel (0) target = $region25
    $region24: #{tpu_custom_call.1} parent=1 // pred_region
      %s173 = ssub.s32 512, 512
      %174 = vsyncadd [#allocation4], %s173
      %s175 = sshll.u32 [#allocation7], 4
      %s176 = int_to_ptr.vmem [resolvable:$true] %s175
      %181 = dma.vmem_to_hbm [thread:$0]  %s176, 512, %s3, [#allocation4], 256, 256, 16
    $region25: #{tpu_custom_call.1} parent=1 // pred_fallthru
      _
    // Predicated region
    $region26: #{tpu_custom_call.1} parent=1 // pred_check
      _
    $region27: #{tpu_custom_call.1} parent=1 // pred_check_branch
      %183 = sbr.rel (0) target = $region29
    $region28: #{tpu_custom_call.1} parent=1 // pred_region
      %184 = dma.done [#allocation4], 512
    $region29: #{tpu_custom_call.1} parent=1 // pred_fallthru
      _
    %185 = vsyncpa [#allocation3], 1
    %186 = vsyncpa [#allocation6], 1
    %187 = vsyncpa [#allocation4], 1

</llo_original>
